<compile_context>
chip_gen: v7x
topology: tpu7x:2x2x1
jax: 0.10.0
libtpu: 0.0.40
codegen_flags: <defaults>
</compile_context>

<pallas_src>
import jax
import jax.numpy as jnp
from jax.experimental import pallas as pl
from jax.experimental.pallas import tpu as pltpu


def _weighted_avg_kernel(w_ref, x_ref, o_ref):
    """w_ref: SMEM (K,) normalized weights.
    x_ref: VMEM (K, TN) slab of x^T (k-major, batch*feature flattened on lanes).
    o_ref: VMEM (1, TN) output slab.
    """
    k_dim = x_ref.shape[0]
    # Unrolled per-k scalar FMA (K is a small, static Python int): stays in the
    # VALU slots, no cross-sublane XLU reduce, no (K, TN) broadcast temporary.
    acc = x_ref[pl.ds(0, 1), :] * w_ref[0]
    for k in range(1, k_dim):
        acc = acc + x_ref[pl.ds(k, 1), :] * w_ref[k]
    o_ref[...] = acc.astype(o_ref.dtype)


def _pick_tile_n(n, k, itemsize, target_bytes=4 << 20):
    """Lane-tile width for the k-major (K, N) layout.

    Sized so one x tile (with K padded up to a sublane multiple of 8) is about
    `target_bytes`; double-buffered this stays well inside even v5e's 16 MiB
    default scoped VMEM (and v7x's 32 MiB). Kept a multiple of 128 lanes so
    DMAs and stores are unmasked. Small inputs fall back to a single
    full-width block (block dim == array dim is always legal).
    """
    k_pad = ((k + 7) // 8) * 8
    tn = (target_bytes // (k_pad * itemsize)) // 128 * 128
    if tn <= 0 or tn >= n or n < 128:
        return n
    return int(tn)


def weighted_average(x, weights, *, tile_n=None):
    """x: [B, K, D], weights: [K] -> [B, D] (same semantics as the module)."""
    B, K, D = x.shape
    N = B * D

    # Hoisted weight normalization: computed once, not once per grid step.
    w_abs = jnp.abs(weights.astype(jnp.float32))
    w_norm = (w_abs / jnp.sum(w_abs)).astype(x.dtype)

    # Layout plumbing only: k-major, lane-dense slab (B, K, D) -> (K, B*D).
    x_t = jnp.transpose(x, (1, 0, 2)).reshape(K, N)

    tn = tile_n if tile_n is not None else _pick_tile_n(N, K, x.dtype.itemsize)
    grid = (pl.cdiv(N, tn),)

    out_flat = pl.pallas_call(
        _weighted_avg_kernel,
        out_shape=jax.ShapeDtypeStruct((1, N), x.dtype),
        grid_spec=pltpu.PrefetchScalarGridSpec(
            num_scalar_prefetch=0,
            grid=grid,
            in_specs=[
                # Normalized weights in SMEM: K cheap scalar reads per step.
                pl.BlockSpec(memory_space=pltpu.MemorySpace.SMEM),
                # x^T slab: lane dim is a multiple of 128 whenever tiled.
                pl.BlockSpec((K, tn), lambda i: (0, i)),
            ],
            out_specs=pl.BlockSpec((1, tn), lambda i: (0, i)),
        ),
        compiler_params=pltpu.CompilerParams(
            # Batch/lane grid axis is independent -> shard across TCs on v7x.
            dimension_semantics=("parallel",)),
    )(w_norm, x_t)

    return out_flat.reshape(B, D)


def weighted_average_ref(x, weights):
    w = jnp.abs(weights)
    w = w / jnp.sum(w)
    return jnp.sum(x * w.reshape(1, -1, 1), axis=1)


if __name__ == "__main__":
    key = jax.random.PRNGKey(0)
    k_w, k_x, k_w2, k_x2 = jax.random.split(key, 4)

    # Small config matching the module: batch=2, dim_size=4, feature len=32.
    B, K, D = 2, 4, 32
    weights = jax.random.normal(k_w, (K,), dtype=jnp.float32)
    x = jax.random.normal(k_x, (B, K, D), dtype=jnp.float32)

    out = jax.block_until_ready(weighted_average(x, weights))
    ref = weighted_average_ref(x, weights)
    assert out.shape == (B, D)
    assert jnp.allclose(out, ref, atol=1e-5, rtol=1e-5), "mismatch vs reference"

    # Exercise the tiled (multi-grid-step) path as well.
    B2, K2, D2 = 16, 6, 128               # N = 2048 -> 8 grid steps at tn=256
    weights2 = jax.random.normal(k_w2, (K2,), dtype=jnp.float32)
    x2 = jax.random.normal(k_x2, (B2, K2, D2), dtype=jnp.float32)
    out2 = jax.block_until_ready(weighted_average(x2, weights2, tile_n=256))
    ref2 = weighted_average_ref(x2, weights2)
    assert out2.shape == (B2, D2)
    assert jnp.allclose(out2, ref2, atol=1e-5, rtol=1e-5), "tiled mismatch"

    print("KERNEL_OK")
</pallas_src>

<mosaic_0001>
module attributes {stable_mosaic.version = 11 : i64} {
  func.func @_weighted_avg_kernel(%arg0: i32, %arg1: memref<4xf32, #tpu.memory_space<smem>>, %arg2: memref<4x64xf32, #tpu.memory_space<vmem>>, %arg3: memref<1x64xf32, #tpu.memory_space<vmem>>) attributes {dimension_semantics = [#tpu.dimension_semantics<parallel>], iteration_bounds = array<i64: 1>, scalar_prefetch = 0 : i64, scratch_operands = 0 : i64, tpu.core_type = #tpu.core_type<tc>, window_params = [{transform_indices = @transform_0, window_bounds = array<i64: 4>}, {transform_indices = @transform_1, window_bounds = array<i64: 4, 64>}, {transform_indices = @transform_2, window_bounds = array<i64: 1, 64>}]} {
    %c0 = arith.constant 0 : index
    %c0_0 = arith.constant 0 : index
    %0 = vector.load %arg2[%c0, %c0_0] : memref<4x64xf32, #tpu.memory_space<vmem>>, vector<1x64xf32>
    %c0_1 = arith.constant 0 : index
    %1 = memref.load %arg1[%c0_1] : memref<4xf32, #tpu.memory_space<smem>>
    %2 = vector.broadcast %1 : f32 to vector<1x64xf32>
    %3 = arith.mulf %0, %2 : vector<1x64xf32>
    %c1 = arith.constant 1 : index
    %c0_2 = arith.constant 0 : index
    %4 = vector.load %arg2[%c1, %c0_2] : memref<4x64xf32, #tpu.memory_space<vmem>>, vector<1x64xf32>
    %c1_3 = arith.constant 1 : index
    %5 = memref.load %arg1[%c1_3] : memref<4xf32, #tpu.memory_space<smem>>
    %6 = vector.broadcast %5 : f32 to vector<1x64xf32>
    %7 = arith.mulf %4, %6 : vector<1x64xf32>
    %8 = arith.addf %3, %7 : vector<1x64xf32>
    %c2 = arith.constant 2 : index
    %c0_4 = arith.constant 0 : index
    %9 = vector.load %arg2[%c2, %c0_4] : memref<4x64xf32, #tpu.memory_space<vmem>>, vector<1x64xf32>
    %c2_5 = arith.constant 2 : index
    %10 = memref.load %arg1[%c2_5] : memref<4xf32, #tpu.memory_space<smem>>
    %11 = vector.broadcast %10 : f32 to vector<1x64xf32>
    %12 = arith.mulf %9, %11 : vector<1x64xf32>
    %13 = arith.addf %8, %12 : vector<1x64xf32>
    %c3 = arith.constant 3 : index
    %c0_6 = arith.constant 0 : index
    %14 = vector.load %arg2[%c3, %c0_6] : memref<4x64xf32, #tpu.memory_space<vmem>>, vector<1x64xf32>
    %c3_7 = arith.constant 3 : index
    %15 = memref.load %arg1[%c3_7] : memref<4xf32, #tpu.memory_space<smem>>
    %16 = vector.broadcast %15 : f32 to vector<1x64xf32>
    %17 = arith.mulf %14, %16 : vector<1x64xf32>
    %18 = arith.addf %13, %17 : vector<1x64xf32>
    %c0_8 = arith.constant 0 : index
    %c0_9 = arith.constant 0 : index
    %19 = vector.load %arg3[%c0_8, %c0_9] : memref<1x64xf32, #tpu.memory_space<vmem>>, vector<1x64xf32>
    tpu.vector_store %arg3[%c0_8, %c0_9], %18 {strides = array<i32>} : memref<1x64xf32, #tpu.memory_space<vmem>>, vector<1x64xf32>,
    return
  }
  func.func @transform_0(%arg0: i32) -> i32 {
    %c0_i32 = arith.constant 0 : i32
    %c0_i32_0 = arith.constant 0 : i32
    return %c0_i32 : i32
  }
  func.func @transform_1(%arg0: i32) -> (i32, i32) {
    %c0_i32 = arith.constant 0 : i32
    %c0_i32_0 = arith.constant 0 : i32
    return %c0_i32, %arg0 : i32, i32
  }
  func.func @transform_2(%arg0: i32) -> (i32, i32) {
    %c0_i32 = arith.constant 0 : i32
    %c0_i32_0 = arith.constant 0 : i32
    return %c0_i32, %arg0 : i32, i32
  }
}

</mosaic_0001>

<llo_original>
// kernel: tpu_custom_call.1
$region0: #{tpu_custom_call.1}
  #allocation0 [shape = 'u32[]', space=smem, size = 0x4, offset = 0x4, fixed_abs, tag = 'smem constant byte address 0x4 - core index']
  #allocation1 [shape = 'u32[144,128]{1,0:T(1,128)}', space=vmem, size = 0x12000, scoped, tag = 'internal scratch']
  %s0 = inlined_call_operand.hbm [shape: f32[4], index: 0, kind: input, shape index: {}]
  %s1 = inlined_call_operand.hbm [shape: f32[4,64], index: 1, kind: input, shape index: {}]
  %s2 = inlined_call_operand.hbm [shape: f32[1,64], index: 2, kind: output, shape index: {}]
  %s3 = sld [smem:[#allocation0]]
  $region26: #{tpu_custom_call.1} parent=0
    _
  %s5 = ssub.s32 1, %s3
  %s6 = scalar_select 0, %s5, %s3
  $region1: #{tpu_custom_call.1} parent=0
    #allocation2 [shape = 'u8[512]{0}', space=smem, size = 0x200, scoped, tag = 'input window, operand 0, single buffered']
    #allocation3 [shape = 's32[1]{0}', space=sflag, size = 0x4, scoped, tag = 'scoped memory for tpu_custom_call.1']
    #allocation4 [shape = 's32[1]{0}', space=sflag, size = 0x4, scoped, tag = 'scoped memory for tpu_custom_call.1']
    #allocation5 [shape = 's32[1]{0}', space=sflag, size = 0x4, scoped, tag = 'scoped memory for tpu_custom_call.1']
    #allocation6 [shape = 'u8[2048]{0}', space=vmem, size = 0x800, scoped, tag = 'input window, operand 1, single buffered']
    #allocation7 [shape = 'u8[512]{0}', space=vmem, size = 0x400, scoped, tag = 'output window, operand 0, single buffered']
    %7 = vsyncpa [#allocation5], 0
    %8 = vsyncpa [#allocation3], 0
    %9 = vsyncpa [#allocation4], 0
    // Predicated region
    $region2: #{tpu_custom_call.1} parent=1 // pred_check
      _
    $region3: #{tpu_custom_call.1} parent=1 // pred_check_branch
      %11 = sbr.rel (0) target = $region5
    $region4: #{tpu_custom_call.1} parent=1 // pred_region
      %s13 = ssub.s32 16, 16
      %14 = vsyncadd [#allocation5], %s13
      %17 = dma.hbm_to_smem %s0, 16, [#allocation2], [#allocation5]
    $region5: #{tpu_custom_call.1} parent=1 // pred_fallthru
      _
    // Predicated region
    $region6: #{tpu_custom_call.1} parent=1 // pred_check
      _
    $region7: #{tpu_custom_call.1} parent=1 // pred_check_branch
      %19 = sbr.rel (0) target = $region9
    $region8: #{tpu_custom_call.1} parent=1 // pred_region
      %s21 = ssub.s32 64, 64
      %22 = vsyncadd [#allocation3], %s21
      %s24 = sshll.u32 [#allocation6], 4
      %s25 = int_to_ptr.vmem [resolvable:$true] %s24
      %27 = dma.hbm_to_vmem [thread:$0]  %s1, 64, %s25, [#allocation3]
    $region9: #{tpu_custom_call.1} parent=1 // pred_fallthru
      _
    // Predicated region
    $region10: #{tpu_custom_call.1} parent=1 // pred_check
      _
    $region11: #{tpu_custom_call.1} parent=1 // pred_check_branch
      %29 = sbr.rel (0) target = $region13
    $region12: #{tpu_custom_call.1} parent=1 // pred_region
      %30 = dma.done [#allocation5], 16
    $region13: #{tpu_custom_call.1} parent=1 // pred_fallthru
      _
    // Predicated region
    $region14: #{tpu_custom_call.1} parent=1 // pred_check
      _
    $region15: #{tpu_custom_call.1} parent=1 // pred_check_branch
      %32 = sbr.rel (0) target = $region17
    $region16: #{tpu_custom_call.1} parent=1 // pred_region
      %33 = dma.done [#allocation3], 64
    $region17: #{tpu_custom_call.1} parent=1 // pred_fallthru
      _
    %34 = sfence
    %v35 = vld [vmem:[#allocation6] sm:$0x1]
    %s36 = sld [smem:[#allocation2]]
    %v37 = vstv %s36
    %v38 = vmul.f32 %v35, %v37
    %v39 = vld [vmem:[#allocation6 + $0x1] sm:$0x1]
    %s40 = sld [smem:[#allocation2 + $0x1]]
    %v41 = vstv %s40
    %v42 = vmul.f32 %v39, %v41
    %v43 = vadd.f32 %v38, %v42
    %v44 = vld [vmem:[#allocation6 + $0x2] sm:$0x1]
    %s45 = sld [smem:[#allocation2 + $0x2]]
    %v46 = vstv %s45
    %v47 = vmul.f32 %v44, %v46
    %v48 = vadd.f32 %v43, %v47
    %v49 = vld [vmem:[#allocation6 + $0x3] sm:$0x1]
    %s50 = sld [smem:[#allocation2 + $0x3]]
    %v51 = vstv %s50
    %v52 = vmul.f32 %v49, %v51
    %v53 = vadd.f32 %v48, %v52
    %vm54 = vcmask 516096
    %55 = vst.msk [vmem:[#allocation7] sm:$0x1] %vm54, %v53
    // Predicated region
    $region18: #{tpu_custom_call.1} parent=1 // pred_check
      _
    $region19: #{tpu_custom_call.1} parent=1 // pred_check_branch
      %57 = sbr.rel (0) target = $region21
    $region20: #{tpu_custom_call.1} parent=1 // pred_region
      %s59 = ssub.s32 16, 16
      %60 = vsyncadd [#allocation4], %s59
      %s62 = sshll.u32 [#allocation7], 4
      %s63 = int_to_ptr.vmem [resolvable:$true] %s62
      %65 = dma.vmem_to_hbm [thread:$0]  %s63, 16, %s2, [#allocation4]
    $region21: #{tpu_custom_call.1} parent=1 // pred_fallthru
      _
    // Predicated region
    $region22: #{tpu_custom_call.1} parent=1 // pred_check
      _
    $region23: #{tpu_custom_call.1} parent=1 // pred_check_branch
      %67 = sbr.rel (0) target = $region25
    $region24: #{tpu_custom_call.1} parent=1 // pred_region
      %68 = dma.done [#allocation4], 16
    $region25: #{tpu_custom_call.1} parent=1 // pred_fallthru
      _
    %69 = vsyncpa [#allocation3], 1
    %70 = vsyncpa [#allocation4], 1
    %71 = vsyncpa [#allocation5], 1

</llo_original>
